<compile_context>
chip_gen: v7x
topology: tpu7x:2x2x1
jax: 0.10.0
libtpu: 0.0.40
codegen_flags: <defaults>
</compile_context>

<pallas_src>
import math

import jax
import jax.numpy as jnp
from jax import lax
from jax.experimental import pallas as pl
from jax.experimental.pallas import tpu as pltpu

# ---------------- static config (small synthetic sizes) ----------------
B = 2            # batch
T = 8            # sequence length (conv H axis)
DIM = 16         # target dim (conv W axis) -- power of two
N = T * DIM      # flattened spatial positions per batch element = 128
C = 8            # residual_channels
H = 32           # residual_hidden
LATENT = 16      # latent_dim
L = 2            # residual_layers
MAX_STEPS = 500  # DiffusionEmbedding max_steps
DILATIONS = tuple(2 ** (l % 2) for l in range(L))

# compact head-input row layout (per (batch, t) column)
HR_EMB = 0                 # 2H rows: gathered sinusoidal embedding
HR_TF = 2 * H              # 5 rows: [future_time_feat, t/t.max()]
HR_ONE = HR_TF + 5         # 1 row of ones (bias folding)
HR_LAT = HR_TF + 8         # LATENT rows
HC_ROWS = HR_LAT + LATENT  # 88


# ---------------- packed-parameter layout: name -> (row0, col0, rows, cols) --------
P_LAYOUT = {
    "W1":     (0,     0, 72, HC_ROWS),   # fused head stage 1 (bias col = HR_ONE)
    "xs_w0":  (0,    88,  8,   8),
    "xt_w0":  (0,    96,  8,   8),
    "xs_w1":  (0,   104,  8,   8),
    "xt_w1":  (0,   112,  8,   8),
    "smallb": (8,    88, 16,   8),       # [w_in, b_in, xs_b0, xs_b1, op_b0, op_b1]
    "op_w0":  (8,    96, 16,   8),
    "op_w1":  (8,   104, 16,   8),
    "W2":     (72,    0, 64,  72),       # fused head stage 2 (bias col = 64)
    "WC":     (136,   0, 32,  72),       # fused conditioning (bias col = 64)
    "dc0":    (168,   0, 16,  80),       # dilated conv + latent 1x1 + biases
    "dc1":    (184,   0, 16,  80),
    "skp":    (200,   0,  8,  80),       # skip 3x3 conv (+bias)
    "outw":   (208,   0,  8,  80),       # output 3x3 conv (+bias), row 0 valid
    "lp2":    (216,   0, 16, 128),       # latent proj 2nd Linear, position-tiled
}
P_ROWS = 232


# ---------------- parameter init (deterministic, synthetic) ----------------
def init_params(key):
    names_shapes = [
        ("w_in", (1, C)), ("b_in", (1, C)),                      # input_projection (1x1, 1->C)
        ("se_w1", (2 * H, H)), ("se_b1", (1, H)),                # DiffusionEmbedding proj1
        ("se_w2", (H, H)), ("se_b2", (1, H)),                    # DiffusionEmbedding proj2
        ("tp_w1", (5, H)), ("tp_b1", (1, H)),                    # time_proj Linear(5,H)
        ("tp_w2", (H, H)), ("tp_b2", (1, H)),                    # time_proj Linear(H,H)
        ("lp_w1", (LATENT, DIM // 2)), ("lp_b1", (1, DIM // 2)), # latent_projection Linear 1
        ("lp_w2", (DIM // 2, DIM)), ("lp_b2", (DIM,)),           # latent_projection Linear 2
        ("sp_w", (L, H, C)), ("sp_b", (L, 1, C)),                # per-layer step_projection
        ("tj_w", (L, H, C)), ("tj_b", (L, 1, C)),                # per-layer time_projection
        ("xs_w", (L, C, C)), ("xs_b", (L, 1, C)),                # x_step_proj 1x1 conv
        ("xt_w", (L, C, C)), ("xt_b", (L, 1, C)),                # x_time_proj 1x1 conv
        ("lc_w", (L, 1, 2 * C)), ("lc_b", (L, 1, 2 * C)),        # latent_projection 1x1 (1->2C)
        ("dc_w", (L, 9, C, 2 * C)), ("dc_b", (L, 1, 2 * C)),     # dilated 3x3 conv (C->2C)
        ("op_w", (L, C, 2 * C)), ("op_b", (L, 1, 2 * C)),        # output_projection 1x1 (C->2C)
        ("skp_w", (9, C, C)), ("skp_b", (1, C)),                 # skip_projection 3x3 (C->C)
        ("out_w", (9, C, 1)), ("out_b", (1, 1)),                 # output_projection 3x3 (C->1)
    ]
    keys = jax.random.split(key, len(names_shapes))
    p = {n: 0.2 * jax.random.normal(k, s, jnp.float32)
         for (n, s), k in zip(names_shapes, keys)}

    # DiffusionEmbedding sinusoidal table: (max_steps, 2H)
    steps = jnp.arange(MAX_STEPS, dtype=jnp.float32)[:, None]
    dims = jnp.arange(H, dtype=jnp.float32)[None, :]
    tab = steps * 10.0 ** (dims * 4.0 / H)
    p["table"] = jnp.concatenate([jnp.sin(tab), jnp.cos(tab)], axis=1)
    return p


# ---------------- parameter packing (fused / block-diagonal, one flat buffer) -------
def pack_params(p):
    hi = jax.lax.Precision.HIGHEST

    def fuse9(w):   # (9, Cin, Cout) -> (Cout, 9*Cin), tap-major along contraction
        return jnp.transpose(w, (2, 0, 1)).reshape(w.shape[2], 9 * w.shape[1])

    ent = {}

    # fused head stage 1: rows [ie(H); te(H); lh(DIM//2)], contraction over headc rows
    W1 = jnp.zeros((72, HC_ROWS), jnp.float32)
    W1 = W1.at[0:H, HR_EMB:HR_EMB + 2 * H].set(p["se_w1"].T)
    W1 = W1.at[0:H, HR_ONE].set(p["se_b1"][0])
    W1 = W1.at[H:2 * H, HR_TF:HR_TF + 5].set(p["tp_w1"].T)
    W1 = W1.at[H:2 * H, HR_ONE].set(p["tp_b1"][0])
    W1 = W1.at[2 * H:2 * H + DIM // 2, HR_LAT:HR_LAT + LATENT].set(p["lp_w1"].T)
    W1 = W1.at[2 * H:2 * H + DIM // 2, HR_ONE].set(p["lp_b1"][0])
    ent["W1"] = W1

    # fused head stage 2: contraction over [ie(H); te(H); one-hot row(8)]
    W2 = jnp.zeros((2 * H, 72), jnp.float32)
    W2 = W2.at[0:H, 0:H].set(p["se_w2"].T)
    W2 = W2.at[0:H, 2 * H].set(p["se_b2"][0])
    W2 = W2.at[H:2 * H, H:2 * H].set(p["tp_w2"].T)
    W2 = W2.at[H:2 * H, 2 * H].set(p["tp_b2"][0])
    ent["W2"] = W2

    # fused conditioning (all layers): rows [i_proj0; t_eff0; i_proj1; t_eff1]
    # t_eff{l} = xt_w^T @ (tj_w^T @ te + tj_b^T) + xt_b^T  (x_time_proj folded in)
    WC = jnp.zeros((4 * C, 72), jnp.float32)
    for l in range(L):
        r = l * 2 * C
        WC = WC.at[r:r + C, 0:H].set(p["sp_w"][l].T)
        WC = WC.at[r:r + C, 2 * H].set(p["sp_b"][l][0])
        w_teff = jnp.matmul(p["tj_w"][l], p["xt_w"][l], precision=hi).T
        b_teff = jnp.matmul(p["tj_b"][l][0], p["xt_w"][l], precision=hi) + p["xt_b"][l][0]
        WC = WC.at[r + C:r + 2 * C, H:2 * H].set(w_teff)
        WC = WC.at[r + C:r + 2 * C, 2 * H].set(b_teff)
    ent["WC"] = WC

    # per-layer 1x1 convs and fused dilated conv (taps | lat_o column | bias column)
    for l in range(L):
        ent[f"xs_w{l}"] = p["xs_w"][l].T
        ent[f"xt_w{l}"] = p["xt_w"][l].T
        ent[f"op_w{l}"] = p["op_w"][l].T
        dca = jnp.zeros((2 * C, 80), jnp.float32)
        dca = dca.at[:, 0:9 * C].set(fuse9(p["dc_w"][l]))
        dca = dca.at[:, 9 * C].set(p["lc_w"][l][0])                       # * lat_o
        dca = dca.at[:, 9 * C + 1].set(p["dc_b"][l][0] + p["lc_b"][l][0])  # * 1
        ent[f"dc{l}"] = dca

    skp = jnp.zeros((C, 80), jnp.float32)
    skp = skp.at[:, 0:9 * C].set(fuse9(p["skp_w"]))
    skp = skp.at[:, 9 * C + 1].set(p["skp_b"][0])
    ent["skp"] = skp

    outw = jnp.zeros((8, 80), jnp.float32)
    outw = outw.at[0:1, 0:9 * C].set(fuse9(p["out_w"]))
    outw = outw.at[0, 9 * C + 1].set(p["out_b"][0, 0])
    ent["outw"] = outw

    # latent_projection second Linear, evaluated per flattened position n = t*DIM + d
    lp2 = jnp.zeros((16, 128), jnp.float32)
    lp2 = lp2.at[0:DIM // 2, :].set(jnp.tile(p["lp_w2"], (1, T)))
    lp2 = lp2.at[DIM // 2, :].set(jnp.tile(p["lp_b2"], T))
    ent["lp2"] = lp2

    sb = jnp.zeros((16, 8), jnp.float32)
    sb = sb.at[0:C, 0].set(p["w_in"][0])
    sb = sb.at[0:C, 1].set(p["b_in"][0])
    sb = sb.at[0:C, 2].set(p["xs_b"][0][0])
    sb = sb.at[0:C, 3].set(p["xs_b"][1][0])
    sb = sb.at[0:2 * C, 4].set(p["op_b"][0][0])
    sb = sb.at[0:2 * C, 5].set(p["op_b"][1][0])
    ent["smallb"] = sb

    buf = jnp.zeros((P_ROWS, 128), jnp.float32)
    for name, arr in ent.items():
        r0, c0, r, c = P_LAYOUT[name]
        assert arr.shape == (r, c), (name, arr.shape, (r, c))
        buf = buf.at[r0:r0 + r, c0:c0 + c].set(arr.astype(jnp.float32))
    return buf


# ---------------- in-kernel helpers ----------------
def _leaky(v):
    return jnp.maximum(v, 0.4 * v)          # LeakyReLU(0.4)


def _silu(v):
    return v * jax.nn.sigmoid(v)


def _dot(a, b):
    return jnp.dot(a, b, preferred_element_type=jnp.float32)


# ---------------- pltpu.roll shift-convention probe (build-time, once) ----------------
_ROLL_NEGATE = None


def _roll_probe_kernel(x_ref, o_ref):
    o_ref[...] = pltpu.roll(x_ref[...], 1, 1)


def _pltpu_roll_negate():
    """True if pltpu.roll rotates opposite to jnp.roll. One tiny build-time launch."""
    global _ROLL_NEGATE
    if _ROLL_NEGATE is None:
        x = jnp.broadcast_to(jnp.arange(128, dtype=jnp.float32)[None, :], (8, 128))
        out = pl.pallas_call(
            _roll_probe_kernel,
            out_shape=jax.ShapeDtypeStruct((8, 128), jnp.float32),
        )(x)
        _ROLL_NEGATE = (float(out[0, 0]) != 127.0)   # jnp.roll(x,1,1)[0,0] == 127
    return _ROLL_NEGATE


def _pick_group():
    """G = batches folded into the lane axis per grid step."""
    try:
        kind = jax.devices()[0].device_kind.lower()
    except Exception:
        return B
    multi_tc = any(s in kind for s in ("v4", "v5p", "v7", "tpu7", "7x"))
    return 1 if multi_tc else B     # keep grid-parallel batches on multi-TC chips


# ---------------- the Pallas kernel (one batch group per grid step) ----------------
def _build_kernel(G, roll_negate):
    NL = G * N     # full lane width (128 per batch element)
    NC = G * T     # compact (per-timestep) lane width

    def lroll(v, s):
        """Lane-axis circular roll over the full NL lanes with jnp.roll semantics."""
        s = s % NL
        if s == 0:
            return v
        if roll_negate:
            s = NL - s
        return pltpu.roll(v, s, 1)

    def kernel(x_ref, head_ref, p_ref, out_ref):
        def getp(name):
            r0, c0, r, c = P_LAYOUT[name]
            return p_ref[r0:r0 + r, c0:c0 + c]

        x = x_ref[0]                                        # (1, NL)
        headc = head_ref[0]                                 # (HC_ROWS, NC)

        lane1 = lax.broadcasted_iota(jnp.int32, (1, NL), 1)
        d_lane = lane1 & (DIM - 1)                          # position within DIM
        seg_lane = lane1 & (N - 1)                          # position within a batch segment

        # compact "ones" padding rows (row 0 == 1.0) for bias folding
        one_c = (lax.broadcasted_iota(jnp.int32, (8, NC), 0) == 0).astype(jnp.float32)

        # ---------- fused head (stage 1/2) + conditioning, at compact width ----------
        h1 = _dot(getp("W1"), headc)                        # (72, NC)
        iec = _silu(h1[0:H, :])
        tec = _leaky(h1[H:2 * H, :])
        lhc = _leaky(h1[2 * H:2 * H + DIM // 2, :])

        h2 = _dot(getp("W2"), jnp.concatenate([iec, tec, one_c], axis=0))   # (64, NC)
        ie2 = _silu(h2[0:H, :])
        te2 = _leaky(h2[H:2 * H, :])

        condc = _dot(getp("WC"), jnp.concatenate([ie2, te2, one_c], axis=0))  # (4C, NC)

        # ---------- expand compact (per-timestep) rows to full lane width ----------
        sel = (lax.broadcasted_iota(jnp.int32, (NC, NL), 1) // DIM
               == lax.broadcasted_iota(jnp.int32, (NC, NL), 0)).astype(jnp.float32)
        exp = _dot(jnp.concatenate([condc, lhc], axis=0), sel)              # (4C+8, NL)
        cond = exp[0:4 * C, :]
        lh = exp[4 * C:4 * C + DIM // 2, :]

        # latent_projection second Linear (position-dependent weights)
        lp2v = getp("lp2")
        lpw = lp2v[0:DIM // 2, :]
        lpb = lp2v[DIM // 2:DIM // 2 + 1, :]
        if G > 1:
            lpw = jnp.concatenate([lpw] * G, axis=1)
            lpb = jnp.concatenate([lpb] * G, axis=1)
        lat_o = _leaky(jnp.sum(lh * lpw, axis=0, keepdims=True) + lpb)      # (1, NL)

        # extra contraction rows for every fused 3x3 conv: [lat_o; 1; 0*6]
        rid8 = lax.broadcasted_iota(jnp.int32, (8, NL), 0)
        extra8 = jnp.where(rid8 == 0, lat_o, jnp.where(rid8 == 1, 1.0, 0.0))

        # ---------- 3x3 circular (dilated) conv as ONE fused matmul ----------
        def conv3x3(v, w_aug, dil):
            rolled = {}

            def seg_roll(s):
                """Per-128-lane-segment circular roll (jnp.roll semantics), deduped."""
                s = s % N
                if s in rolled:
                    return rolled[s]
                if s == 0:
                    r = v
                elif G == 1:
                    r = lroll(v, s)
                else:
                    r = jnp.where(seg_lane >= s, lroll(v, s), lroll(v, s - N))
                rolled[s] = r
                return r

            taps = []
            for kh in range(3):
                g = ((-(kh - 1) * dil) % T) * DIM           # time-axis part of the shift
                for kw in range(3):
                    sw = (-(kw - 1) * dil) % DIM            # dim-axis part of the shift
                    if sw == 0:
                        taps.append(seg_roll(g))
                    else:
                        taps.append(jnp.where(d_lane >= sw,
                                              seg_roll(g + sw),
                                              seg_roll(g + sw - DIM)))
            taps.append(extra8)
            return _dot(w_aug, jnp.concatenate(taps, axis=0))

        # ---------- input projection (1x1 conv, 1 -> C) + LeakyReLU ----------
        sb = getp("smallb")
        w_in = sb[0:C, 0:1]
        b_in = sb[0:C, 1:2]
        xcur = _leaky(w_in * x + b_in)                                      # (C, NL)

        # ---------- residual layers ----------
        skip = jnp.zeros((C, NL), jnp.float32)
        for l in range(L):
            i_proj = cond[l * 2 * C:l * 2 * C + C, :]
            t_eff = cond[l * 2 * C + C:l * 2 * C + 2 * C, :]
            xs_b = sb[0:C, 2 + l:3 + l]
            op_b = sb[0:2 * C, 4 + l:5 + l]

            y = xcur + i_proj
            y = y + _leaky(_dot(getp(f"xs_w{l}"), y) + xs_b)
            y = y + _leaky(_dot(getp(f"xt_w{l}"), y) + t_eff)
            z = conv3x3(y, getp(f"dc{l}"), DILATIONS[l])                    # (2C, NL)
            y = jax.nn.sigmoid(z[0:C, :]) * jnp.tanh(z[C:2 * C, :])
            y = _leaky(_dot(getp(f"op_w{l}"), y) + op_b)                    # (2C, NL)
            xcur = (xcur + y[0:C, :]) * (1.0 / math.sqrt(2.0))
            skip = skip + y[C:2 * C, :]

        xo = skip * (1.0 / math.sqrt(float(L)))

        zs = _leaky(conv3x3(xo, getp("skp"), 1))                            # (C, NL)
        oo = conv3x3(zs, getp("outw"), 1)                                   # (8, NL)
        out_ref[0] = oo[0:1, :]

    return kernel


# ---------------- wrapper ----------------
def make_forward(params):
    G = _pick_group()
    NL = G * N
    NC = G * T
    NB = B // G

    kernel = _build_kernel(G, _pltpu_roll_negate())
    pbuf = pack_params(params)            # (P_ROWS, 128) packed weights (single DMA)
    table = params["table"]

    call = pl.pallas_call(
        kernel,
        out_shape=jax.ShapeDtypeStruct((NB, 1, NL), jnp.float32),
        grid=(NB,),
        in_specs=[
            pl.BlockSpec((1, 1, NL), lambda b: (b, 0, 0)),          # x (full width)
            pl.BlockSpec((1, HC_ROWS, NC), lambda b: (b, 0, 0)),    # compact head data
            pl.BlockSpec((P_ROWS, 128), lambda b: (0, 0)),          # packed params (shared)
        ],
        out_specs=pl.BlockSpec((1, 1, NL), lambda b: (b, 0, 0)),    # lane-dense output
        compiler_params=pltpu.CompilerParams(dimension_semantics=("parallel",)),
    )

    @jax.jit
    def forward(x, t, i, latent, future_time_feat):
        # ---- JAX glue: layout plumbing only ----
        # TODO(synk): the data-dependent sinusoidal-table gather stays in JAX glue,
        # not inside the Pallas kernel.
        idx = i[..., 0].astype(jnp.int32)                           # (B, T)
        emb = jnp.take(table, idx, axis=0)                          # (B, T, 2H)
        tf = jnp.concatenate([future_time_feat, t / jnp.max(t)], axis=-1)   # (B, T, 5)
        ones = jnp.ones((B, T, 1), jnp.float32)
        zer2 = jnp.zeros((B, T, 2), jnp.float32)
        head = jnp.concatenate([emb, tf, ones, zer2, latent], axis=-1)      # (B, T, 88)
        head = jnp.transpose(head, (0, 2, 1))                               # (B, 88, T)
        head = head.reshape(NB, G, HC_ROWS, T).transpose(0, 2, 1, 3).reshape(NB, HC_ROWS, NC)
        xin = x.reshape(NB, G, 1, N).transpose(0, 2, 1, 3).reshape(NB, 1, NL)

        out = call(xin.astype(jnp.float32), head.astype(jnp.float32), pbuf)  # (NB, 1, NL)
        return out.reshape(B, T, DIM)

    return forward


# ---------------- pure-JAX reference (mirrors the PyTorch forward) ----------------
def ref_forward(P, x, t, i, latent, ftf):
    leaky = lambda v: jnp.maximum(v, 0.4 * v)
    silu = lambda v: v * jax.nn.sigmoid(v)

    h = leaky(x[..., None] * P["w_in"][0] + P["b_in"][0])               # (B,T,DIM,C)
    idx = i[..., 0].astype(jnp.int32)
    e = P["table"][idx]
    ie = silu(e @ P["se_w1"] + P["se_b1"][0])
    ie = silu(ie @ P["se_w2"] + P["se_b2"][0])
    tf = jnp.concatenate([ftf, t / jnp.max(t)], axis=-1)
    te = leaky(tf @ P["tp_w1"] + P["tp_b1"][0])
    te = leaky(te @ P["tp_w2"] + P["tp_b2"][0])
    lh = leaky(latent @ P["lp_w1"] + P["lp_b1"][0])
    lo = leaky(lh @ P["lp_w2"] + P["lp_b2"])                            # (B,T,DIM)

    xcur = h
    skip_agg = 0.0
    for l in range(L):
        dil = DILATIONS[l]
        ip = ie @ P["sp_w"][l] + P["sp_b"][l][0]
        tp_ = te @ P["tj_w"][l] + P["tj_b"][l][0]
        latp = lo[..., None] * P["lc_w"][l][0] + P["lc_b"][l][0]
        y = xcur + ip[:, :, None, :]
        y = y + leaky(y @ P["xs_w"][l] + P["xs_b"][l][0])
        y = y + leaky((y + tp_[:, :, None, :]) @ P["xt_w"][l] + P["xt_b"][l][0])
        z = 0.0
        for kh in range(3):
            for kw in range(3):
                ys = jnp.roll(y, shift=(-(kh - 1) * dil, -(kw - 1) * dil), axis=(1, 2))
                z = z + ys @ P["dc_w"][l, kh * 3 + kw]
        z = z + P["dc_b"][l][0] + latp
        gate, filt = z[..., :C], z[..., C:]
        y = jax.nn.sigmoid(gate) * jnp.tanh(filt)
        y = leaky(y @ P["op_w"][l] + P["op_b"][l][0])
        resid, skip = y[..., :C], y[..., C:]
        xcur = (xcur + resid) / math.sqrt(2.0)
        skip_agg = skip_agg + skip

    xo = skip_agg / math.sqrt(float(L))
    z = 0.0
    for kh in range(3):
        for kw in range(3):
            ys = jnp.roll(xo, shift=(-(kh - 1), -(kw - 1)), axis=(1, 2))
            z = z + ys @ P["skp_w"][kh * 3 + kw]
    z = leaky(z + P["skp_b"][0])
    o = 0.0
    for kh in range(3):
        for kw in range(3):
            ys = jnp.roll(z, shift=(-(kh - 1), -(kw - 1)), axis=(1, 2))
            o = o + ys @ P["out_w"][kh * 3 + kw]
    o = o + P["out_b"][0]
    return o[..., 0]


if __name__ == "__main__":
    key = jax.random.PRNGKey(0)
    pk, xk, tk, ik, lk, fk = jax.random.split(key, 6)
    params = init_params(pk)

    x = jax.random.normal(xk, (B, T, DIM), jnp.float32)
    t = jax.random.uniform(tk, (B, T, 1), jnp.float32, 0.1, 1.0)
    i = jax.random.randint(ik, (B, T, 1), 0, 100).astype(jnp.float32)
    latent = jax.random.normal(lk, (B, T, LATENT), jnp.float32)
    future_time_feat = jax.random.normal(fk, (B, T, 4), jnp.float32)

    forward = make_forward(params)
    out = jax.block_until_ready(forward(x, t, i, latent, future_time_feat))
    assert out.shape == (B, T, DIM)

    ref = ref_forward(params, x, t, i, latent, future_time_feat)
    max_err = float(jnp.max(jnp.abs(out - ref)))
    scale = float(jnp.max(jnp.abs(ref)))
    tol = max(2e-2, 5e-2 * scale)   # default (non-HIGHEST) matmul precision on both sides
    if not (max_err <= tol):
        raise AssertionError(
            f"kernel/reference mismatch: max abs err = {max_err:.3e} (tol {tol:.3e})")

    print("KERNEL_OK")
</pallas_src>

<mosaic_0001>
module attributes {stable_mosaic.version = 11 : i64} {
  func.func @_roll_probe_kernel(%arg0: memref<8x128xf32, #tpu.memory_space<vmem>>, %arg1: memref<8x128xf32, #tpu.memory_space<vmem>>) attributes {dimension_semantics = [], scalar_prefetch = 0 : i64, scratch_operands = 0 : i64, tpu.core_type = #tpu.core_type<tc>} {
    %c0 = arith.constant 0 : index
    %c0_0 = arith.constant 0 : index
    %0 = vector.load %arg0[%c0, %c0_0] : memref<8x128xf32, #tpu.memory_space<vmem>>, vector<8x128xf32>
    %c1_i32 = arith.constant 1 : i32
    %1 = tpu.dynamic_rotate %0 by %c1_i32 dim 1 : vector<8x128xf32>, i32 -> vector<8x128xf32>
    %c0_1 = arith.constant 0 : index
    %c0_2 = arith.constant 0 : index
    %2 = vector.load %arg1[%c0_1, %c0_2] : memref<8x128xf32, #tpu.memory_space<vmem>>, vector<8x128xf32>
    tpu.vector_store %arg1[%c0_1, %c0_2], %1 {strides = array<i32>} : memref<8x128xf32, #tpu.memory_space<vmem>>, vector<8x128xf32>,
    return
  }
}

</mosaic_0001>

<llo_original>
// kernel: tpu_custom_call.1
$region0: #{tpu_custom_call.1}
  #allocation0 [shape = 'u32[]', space=smem, size = 0x4, offset = 0x4, fixed_abs, tag = 'smem constant byte address 0x4 - core index']
  #allocation1 [shape = 'u32[144,128]{1,0:T(1,128)}', space=vmem, size = 0x12000, scoped, tag = 'internal scratch']
  %s0 = inlined_call_operand.hbm [shape: f32[8,128], index: 0, kind: input, shape index: {}]
  %s1 = inlined_call_operand.hbm [shape: f32[8,128], index: 1, kind: output, shape index: {}]
  %s2 = sld [smem:[#allocation0]]
  $region18: #{tpu_custom_call.1} parent=0
    _
  %s4 = ssub.s32 1, %s2
  %s5 = scalar_select 0, %s4, %s2
  $region1: #{tpu_custom_call.1} parent=0
    #allocation2 [shape = 'u8[4096]{0}', space=vmem, size = 0x1000, scoped, tag = 'input window, operand 0, single buffered']
    #allocation3 [shape = 's32[1]{0}', space=sflag, size = 0x4, scoped, tag = 'scoped memory for tpu_custom_call.1']
    #allocation4 [shape = 's32[1]{0}', space=sflag, size = 0x4, scoped, tag = 'scoped memory for tpu_custom_call.1']
    #allocation5 [shape = 'u8[4096]{0}', space=vmem, size = 0x1000, scoped, tag = 'output window, operand 0, single buffered']
    %6 = vsyncpa [#allocation3], 0
    %7 = vsyncpa [#allocation4], 0
    // Predicated region
    $region2: #{tpu_custom_call.1} parent=1 // pred_check
      _
    $region3: #{tpu_custom_call.1} parent=1 // pred_check_branch
      %9 = sbr.rel (0) target = $region5
    $region4: #{tpu_custom_call.1} parent=1 // pred_region
      %s11 = ssub.s32 128, 128
      %12 = vsyncadd [#allocation3], %s11
      %s14 = sshll.u32 [#allocation2], 4
      %s15 = int_to_ptr.vmem [resolvable:$true] %s14
      %17 = dma.hbm_to_vmem [thread:$0]  %s0, 128, %s15, [#allocation3]
    $region5: #{tpu_custom_call.1} parent=1 // pred_fallthru
      _
    // Predicated region
    $region6: #{tpu_custom_call.1} parent=1 // pred_check
      _
    $region7: #{tpu_custom_call.1} parent=1 // pred_check_branch
      %19 = sbr.rel (0) target = $region9
    $region8: #{tpu_custom_call.1} parent=1 // pred_region
      %20 = dma.done [#allocation3], 128
    $region9: #{tpu_custom_call.1} parent=1 // pred_fallthru
      _
    %v21 = vld [vmem:[#allocation2] sm:$0xff]
    %22 = vrot.lane.b32.xlu0 %v21, 1
    %v23 = vpop.permute.xlu0 %22
    %24 = vst [vmem:[#allocation5] sm:$0xff] %v23
    // Predicated region
    $region10: #{tpu_custom_call.1} parent=1 // pred_check
      _
    $region11: #{tpu_custom_call.1} parent=1 // pred_check_branch
      %26 = sbr.rel (0) target = $region13
    $region12: #{tpu_custom_call.1} parent=1 // pred_region
      %s28 = ssub.s32 128, 128
      %29 = vsyncadd [#allocation4], %s28
      %s31 = sshll.u32 [#allocation5], 4
      %s32 = int_to_ptr.vmem [resolvable:$true] %s31
      %34 = dma.vmem_to_hbm [thread:$0]  %s32, 128, %s1, [#allocation4]
    $region13: #{tpu_custom_call.1} parent=1 // pred_fallthru
      _
    // Predicated region
    $region14: #{tpu_custom_call.1} parent=1 // pred_check
      _
    $region15: #{tpu_custom_call.1} parent=1 // pred_check_branch
      %36 = sbr.rel (0) target = $region17
    $region16: #{tpu_custom_call.1} parent=1 // pred_region
      %37 = dma.done [#allocation4], 128
    $region17: #{tpu_custom_call.1} parent=1 // pred_fallthru
      _
    %38 = vsyncpa [#allocation3], 1
    %39 = vsyncpa [#allocation4], 1

</llo_original>
